<compile_context>
chip_gen: v7x
topology: tpu7x:2x2x1
jax: 0.10.0
libtpu: 0.0.40
codegen_flags: <defaults>
</compile_context>

<pallas_src>
import functools

import jax
import jax.numpy as jnp
from jax import lax
from jax.experimental import pallas as pl
from jax.experimental.pallas import tpu as pltpu


def _bce_vs_ones(x):
    # F.binary_cross_entropy(x, ones_like(x)) == -clamp(log(x), min=-100)
    #                                         == min(-log(x), 100)
    return jnp.minimum(-jnp.log(x), 100.0)


def _round_up(x, m):
    return ((x + m - 1) // m) * m


def _sem_scal_partial_kernel(pred_ref, gt_ref, nom_ref, sump_ref, tsum_ref,
                             *, approx_recip: bool):
    """Accumulate per-(batch, class) partial sums over one (B, C, TILE_N) tile."""
    t = pl.program_id(1)

    @pl.when(t == 0)
    def _init():
        nom_ref[...] = jnp.zeros_like(nom_ref)
        sump_ref[...] = jnp.zeros_like(sump_ref)
        tsum_ref[...] = jnp.zeros_like(tsum_ref)

    logits = pred_ref[...].astype(jnp.float32)          # (B, C, TN) f32 (bf16 upcast)
    gt = gt_ref[...].astype(jnp.int32)                  # (B, TN)    int16 -> int32
    B, C, TN = logits.shape

    # Softmax over the class (sublane) axis, reciprocal-multiply form:
    # one (approx -> EUP vrcp) reciprocal per lane column, then C multiplies.
    m = jnp.max(logits, axis=1, keepdims=True)          # (B, 1, TN)
    e = jnp.exp(logits - m)                             # (B, C, TN)
    inv = pl.reciprocal(jnp.sum(e, axis=1, keepdims=True), approx=approx_recip)
    p = e * inv                                         # (B, C, TN)

    # Fused one-hot target.  No per-element validity mask: ragged-N padding is
    # zero-logit (uniform softmax) with gt == -1, so it never hits `tgt` and
    # its contribution to sum_p is removed analytically in the finalize.
    cls = lax.broadcasted_iota(jnp.int32, (B, C, TN), 1)
    tgt = (gt[:, None, :] == cls).astype(jnp.float32)   # (B, C, TN)

    # TODO(synk): when C < 8 each f32 vreg only fills C of 8 sublanes; folding
    # pairs of 128-lane columns into the unused sublanes (or padding C to 8 on
    # compute-bound v7x) would ~2x VPU/EUP throughput, but needs a
    # lane->sublane relayout that has no clean Mosaic lowering today.
    nom_ref[...] += jnp.sum(p * tgt, axis=2)[None]      # (1, B, C)
    tsum_ref[...] += jnp.sum(tgt, axis=2)[None]
    sump_ref[...] += jnp.sum(p, axis=2)[None]


def _choose_tiling(N, num_splits, bytes_per_col, target_block_bytes, tile_n):
    """Pick a lane-tile size near the byte budget, balanced to minimize padding."""
    per_split = pl.cdiv(N, num_splits)
    if tile_n is None:
        budget_cols = max(128, (target_block_bytes // bytes_per_col) // 128 * 128)
        tiles_per_split = max(1, pl.cdiv(per_split, budget_cols))
        tile_n = _round_up(pl.cdiv(per_split, tiles_per_split), 128)
    else:
        tile_n = max(128, _round_up(int(tile_n), 128))
        tile_n = min(tile_n, _round_up(per_split, 128))
        tiles_per_split = pl.cdiv(per_split, tile_n)
    n_padded = num_splits * tiles_per_split * tile_n
    return tile_n, tiles_per_split, n_padded


def sem_scal_loss(pred, gt, class_weights=None, loss_weight=1.0, *,
                  tile_n=None, num_splits=1,
                  target_block_bytes=4 * 1024 * 1024,
                  vmem_limit_bytes=32 * 1024 * 1024,
                  approx_reciprocal=True, core_parallel=False):
    """pred: (B, C, N) or (B, C, *spatial) logits; gt: (B, N) or (B, *spatial) labels."""
    if pred.ndim > 3:
        pred = pred.reshape(pred.shape[0], pred.shape[1], -1)
    if gt.ndim > 2:
        gt = gt.reshape(gt.shape[0], -1)
    if pred.dtype not in (jnp.float32, jnp.bfloat16):
        pred = pred.astype(jnp.float32)
    # Class labels (incl. a 255 "ignore" sentinel) fit in int16 -> halves gt HBM traffic.
    gt = gt.astype(jnp.int16)

    B, C, N = pred.shape
    if class_weights is None:
        class_weights = [1.0] * C
    assert len(class_weights) == C
    w = jnp.asarray(class_weights, jnp.float32)

    # Byte-budgeted tiling: double-buffered pred+gt blocks stay well below the
    # VMEM limit (32 MiB is valid on v5e/v6e/v7x alike).
    pred_item = jnp.dtype(pred.dtype).itemsize
    gt_item = jnp.dtype(gt.dtype).itemsize
    target = min(int(target_block_bytes),
                 max(1 << 20, (int(vmem_limit_bytes) - (2 << 20)) // 3))
    tile_n, tiles_per_split, n_padded = _choose_tiling(
        N, num_splits, B * C * pred_item, target, tile_n)

    n_pad = n_padded - N
    if n_pad:
        # Zero-logit padding => exactly uniform softmax (1/C per class); gt=-1
        # never matches a class id, so only sum_p needs the analytic fixup.
        pred = jnp.pad(pred, ((0, 0), (0, 0), (0, n_pad)))
        gt = jnp.pad(gt, ((0, 0), (0, n_pad)), constant_values=-1)

    kernel = functools.partial(_sem_scal_partial_kernel,
                               approx_recip=bool(approx_reciprocal))

    if core_parallel and num_splits > 1:
        # v7x: shard the independent N halves across the 2 TensorCores.
        dim_sem = (pltpu.CORE_PARALLEL, pltpu.ARBITRARY)
    else:
        dim_sem = ("parallel", "arbitrary")

    acc_spec = pl.BlockSpec((1, B, C), lambda h, t: (h, 0, 0))
    nom, sum_p, tsum = pl.pallas_call(
        kernel,
        out_shape=(
            jax.ShapeDtypeStruct((num_splits, B, C), jnp.float32),
            jax.ShapeDtypeStruct((num_splits, B, C), jnp.float32),
            jax.ShapeDtypeStruct((num_splits, B, C), jnp.float32),
        ),
        grid=(num_splits, tiles_per_split),
        in_specs=[
            pl.BlockSpec((B, C, tile_n),
                         lambda h, t: (0, 0, h * tiles_per_split + t)),
            pl.BlockSpec((B, tile_n),
                         lambda h, t: (0, h * tiles_per_split + t)),
        ],
        out_specs=(acc_spec, acc_spec, acc_spec),
        compiler_params=pltpu.CompilerParams(
            dimension_semantics=dim_sem,
            vmem_limit_bytes=int(vmem_limit_bytes)),
        cost_estimate=pl.CostEstimate(
            flops=8 * B * C * n_padded,
            transcendentals=B * C * n_padded,
            bytes_accessed=(pred_item * B * C * n_padded
                            + gt_item * B * n_padded
                            + 3 * 4 * num_splits * B * C)),
    )(pred, gt)

    # O(B*C) finalize in plain JAX on the fully-accumulated sums.
    nom = jnp.sum(nom, axis=0)                                # (B, C)
    tsum = jnp.sum(tsum, axis=0)                              # (B, C)
    # Remove the uniform-softmax contribution of the n_pad zero-logit columns.
    sum_p = jnp.sum(sum_p, axis=0) - jnp.float32(n_pad) / jnp.float32(C)

    n_total = jnp.float32(N)
    neg_nom = n_total - sum_p - tsum + nom      # == sum((1-p)*(1-tgt)) over real cols
    neg_cnt = n_total - tsum

    mask = tsum > 0.0
    loss_prec = jnp.where(
        mask & (sum_p > 0.0),
        _bce_vs_ones(nom / jnp.where(sum_p > 0.0, sum_p, 1.0)), 0.0)
    loss_rec = jnp.where(
        mask,
        _bce_vs_ones(nom / jnp.where(mask, tsum, 1.0)), 0.0)
    loss_spec = jnp.where(
        mask & (neg_cnt > 0.0),
        _bce_vs_ones(neg_nom / jnp.where(neg_cnt > 0.0, neg_cnt, 1.0)), 0.0)

    per_class = loss_prec + loss_rec + loss_spec              # (B, C)
    loss_b = jnp.sum(per_class * w[None, :], axis=1)          # (B,)
    count_b = jnp.sum(mask.astype(jnp.float32), axis=1)       # (B,)
    return loss_weight * jnp.mean(loss_b / count_b)


def sem_scal_loss_ref(pred, gt, class_weights=None, loss_weight=1.0):
    """Pure-JAX reference mirroring the PyTorch forward."""
    B, C, N = pred.shape
    if class_weights is None:
        class_weights = [1.0] * C
    p_all = jax.nn.softmax(pred.astype(jnp.float32), axis=1)
    loss = jnp.zeros(B, jnp.float32)
    count = jnp.zeros(B, jnp.float32)
    for c in range(C):
        p = p_all[:, c, :]
        tgt = (gt == c).astype(jnp.float32)
        tsum = tgt.sum(axis=1)
        mask = tsum > 0
        nom = (p * tgt).sum(axis=1)
        sum_p = p.sum(axis=1)
        neg_nom = ((1.0 - p) * (1.0 - tgt)).sum(axis=1)
        neg_cnt = (1.0 - tgt).sum(axis=1)
        lp = jnp.where(mask & (sum_p > 0),
                       _bce_vs_ones(nom / jnp.where(sum_p > 0, sum_p, 1.0)), 0.0)
        lr = jnp.where(mask,
                       _bce_vs_ones(nom / jnp.where(tsum > 0, tsum, 1.0)), 0.0)
        ls = jnp.where(mask & (neg_cnt > 0),
                       _bce_vs_ones(neg_nom / jnp.where(neg_cnt > 0, neg_cnt, 1.0)), 0.0)
        loss = loss + class_weights[c] * (lp + lr + ls)
        count = count + mask.astype(jnp.float32)
    return loss_weight * jnp.mean(loss / count)


if __name__ == "__main__":
    B, C = 2, 4
    H, W, D = 10, 10, 10            # flattened spatial size N = 1000 (ragged)
    N = H * W * D
    key = jax.random.PRNGKey(0)
    k1, k2 = jax.random.split(key)
    pred = jax.random.normal(k1, (B, C, N), dtype=jnp.float32)
    gt = jax.random.randint(k2, (B, N), 0, C, dtype=jnp.int32)

    class_weights = [1.0, 0.5, 2.0, 1.5]
    loss_weight = 1.0

    ref = sem_scal_loss_ref(pred, gt, class_weights, loss_weight)

    # 1) Default config: auto byte-budgeted tile, single split, approx reciprocal.
    out = jax.block_until_ready(
        sem_scal_loss(pred, gt, class_weights, loss_weight))
    assert jnp.allclose(out, ref, rtol=5e-3, atol=1e-3), (out, ref)

    # 2) Force the multi-tile + parallel-split + ragged-padding paths
    #    (exact reciprocal -> tight tolerance).
    out2 = jax.block_until_ready(
        sem_scal_loss(pred, gt, class_weights, loss_weight,
                      tile_n=128, num_splits=2, approx_reciprocal=False))
    assert jnp.allclose(out2, ref, rtol=1e-4, atol=1e-4), (out2, ref)

    # 3) bf16 pred path (halves the dominant HBM stream; upcast in-kernel).
    pred_bf16 = pred.astype(jnp.bfloat16)
    ref_bf16 = sem_scal_loss_ref(pred_bf16.astype(jnp.float32), gt,
                                 class_weights, loss_weight)
    out3 = jax.block_until_ready(
        sem_scal_loss(pred_bf16, gt, class_weights, loss_weight))
    assert jnp.allclose(out3, ref_bf16, rtol=5e-3, atol=1e-3), (out3, ref_bf16)

    print("KERNEL_OK")
</pallas_src>

<mosaic_0001>
module attributes {stable_mosaic.version = 11 : i64} {
  func.func @_sem_scal_partial_kernel(%arg0: i32, %arg1: i32, %arg2: memref<2x4x1024xf32, #tpu.memory_space<vmem>>, %arg3: memref<2x1024xi16, #tpu.memory_space<vmem>>, %arg4: memref<1x2x4xf32, #tpu.memory_space<vmem>>, %arg5: memref<1x2x4xf32, #tpu.memory_space<vmem>>, %arg6: memref<1x2x4xf32, #tpu.memory_space<vmem>>) attributes {dimension_semantics = [#tpu.dimension_semantics<parallel>, #tpu.dimension_semantics<arbitrary>], iteration_bounds = array<i64: 1, 1>, scalar_prefetch = 0 : i64, scratch_operands = 0 : i64, tpu.core_type = #tpu.core_type<tc>, window_params = [{transform_indices = @transform_0, window_bounds = array<i64: 2, 4, 1024>}, {transform_indices = @transform_1, window_bounds = array<i64: 2, 1024>}, {transform_indices = @transform_2, window_bounds = array<i64: 1, 2, 4>}, {transform_indices = @transform_3, window_bounds = array<i64: 1, 2, 4>}, {transform_indices = @transform_4, window_bounds = array<i64: 1, 2, 4>}]} {
    %c0_i32 = arith.constant 0 : i32
    %0 = arith.cmpi eq, %arg1, %c0_i32 : i32
    %1 = arith.extui %0 : i1 to i32
    %c0_i32_0 = arith.constant 0 : i32
    %2 = arith.cmpi ne, %1, %c0_i32_0 : i32
    scf.if %2 {
      %cst_27 = arith.constant 0.000000e+00 : f32
      %38 = vector.broadcast %cst_27 : f32 to vector<1x2x4xf32>
      %c0_28 = arith.constant 0 : index
      %c0_29 = arith.constant 0 : index
      %c0_30 = arith.constant 0 : index
      %39 = vector.load %arg4[%c0_28, %c0_29, %c0_30] : memref<1x2x4xf32, #tpu.memory_space<vmem>>, vector<1x2x4xf32>
      tpu.vector_store %arg4[%c0_28, %c0_29, %c0_30], %38 {strides = array<i32>} : memref<1x2x4xf32, #tpu.memory_space<vmem>>, vector<1x2x4xf32>,
      %cst_31 = arith.constant 0.000000e+00 : f32
      %40 = vector.broadcast %cst_31 : f32 to vector<1x2x4xf32>
      %c0_32 = arith.constant 0 : index
      %c0_33 = arith.constant 0 : index
      %c0_34 = arith.constant 0 : index
      %41 = vector.load %arg5[%c0_32, %c0_33, %c0_34] : memref<1x2x4xf32, #tpu.memory_space<vmem>>, vector<1x2x4xf32>
      tpu.vector_store %arg5[%c0_32, %c0_33, %c0_34], %40 {strides = array<i32>} : memref<1x2x4xf32, #tpu.memory_space<vmem>>, vector<1x2x4xf32>,
      %cst_35 = arith.constant 0.000000e+00 : f32
      %42 = vector.broadcast %cst_35 : f32 to vector<1x2x4xf32>
      %c0_36 = arith.constant 0 : index
      %c0_37 = arith.constant 0 : index
      %c0_38 = arith.constant 0 : index
      %43 = vector.load %arg6[%c0_36, %c0_37, %c0_38] : memref<1x2x4xf32, #tpu.memory_space<vmem>>, vector<1x2x4xf32>
      tpu.vector_store %arg6[%c0_36, %c0_37, %c0_38], %42 {strides = array<i32>} : memref<1x2x4xf32, #tpu.memory_space<vmem>>, vector<1x2x4xf32>,
    } else {
    }
    %c0 = arith.constant 0 : index
    %c0_1 = arith.constant 0 : index
    %c0_2 = arith.constant 0 : index
    %3 = vector.load %arg2[%c0, %c0_1, %c0_2] : memref<2x4x1024xf32, #tpu.memory_space<vmem>>, vector<2x4x1024xf32>
    %c0_3 = arith.constant 0 : index
    %c0_4 = arith.constant 0 : index
    %4 = vector.load %arg3[%c0_3, %c0_4] : memref<2x1024xi16, #tpu.memory_space<vmem>>, vector<2x1024xi16>
    %5 = arith.extsi %4 : vector<2x1024xi16> to vector<2x1024xi32>
    %cst = arith.constant dense<0xFF800000> : vector<2x1024xf32>
    %6 = vector.multi_reduction <maximumf>, %3, %cst [1] : vector<2x4x1024xf32> to vector<2x1024xf32>
    %7 = vector.shape_cast %6 : vector<2x1024xf32> to vector<2x1x1024xf32>
    %8 = vector.broadcast %7 : vector<2x1x1024xf32> to vector<2x4x1024xf32>
    %9 = arith.subf %3, %8 : vector<2x4x1024xf32>
    %10 = math.exp %9 : vector<2x4x1024xf32>
    %cst_5 = arith.constant dense<0.000000e+00> : vector<2x1024xf32>
    %11 = vector.multi_reduction <add>, %10, %cst_5 [1] : vector<2x4x1024xf32> to vector<2x1024xf32>
    %12 = vector.shape_cast %11 : vector<2x1024xf32> to vector<2x1x1024xf32>
    %13 = tpu.reciprocal %12 {approx = true} : vector<2x1x1024xf32> -> vector<2x1x1024xf32>
    %14 = vector.broadcast %13 : vector<2x1x1024xf32> to vector<2x4x1024xf32>
    %15 = arith.mulf %10, %14 : vector<2x4x1024xf32>
    %16 = tpu.iota {dimensions = array<i32: 1>} : vector<2x4x1024xi32>
    %17 = vector.shape_cast %5 : vector<2x1024xi32> to vector<2x1x1024xi32>
    %18 = vector.broadcast %17 : vector<2x1x1024xi32> to vector<2x4x1024xi32>
    %19 = arith.cmpi eq, %18, %16 : vector<2x4x1024xi32>
    %20 = arith.extui %19 : vector<2x4x1024xi1> to vector<2x4x1024xi32>
    %21 = arith.sitofp %20 : vector<2x4x1024xi32> to vector<2x4x1024xf32>
    %c0_6 = arith.constant 0 : index
    %c0_7 = arith.constant 0 : index
    %c0_8 = arith.constant 0 : index
    %22 = vector.load %arg4[%c0_6, %c0_7, %c0_8] : memref<1x2x4xf32, #tpu.memory_space<vmem>>, vector<1x2x4xf32>
    %23 = arith.mulf %15, %21 : vector<2x4x1024xf32>
    %cst_9 = arith.constant dense<0.000000e+00> : vector<2x4xf32>
    %24 = vector.multi_reduction <add>, %23, %cst_9 [2] : vector<2x4x1024xf32> to vector<2x4xf32>
    %25 = vector.shape_cast %24 : vector<2x4xf32> to vector<1x2x4xf32>
    %26 = arith.addf %22, %25 : vector<1x2x4xf32>
    %c0_10 = arith.constant 0 : index
    %c0_11 = arith.constant 0 : index
    %c0_12 = arith.constant 0 : index
    %27 = vector.load %arg4[%c0_10, %c0_11, %c0_12] : memref<1x2x4xf32, #tpu.memory_space<vmem>>, vector<1x2x4xf32>
    tpu.vector_store %arg4[%c0_10, %c0_11, %c0_12], %26 {strides = array<i32>} : memref<1x2x4xf32, #tpu.memory_space<vmem>>, vector<1x2x4xf32>,
    %c0_13 = arith.constant 0 : index
    %c0_14 = arith.constant 0 : index
    %c0_15 = arith.constant 0 : index
    %28 = vector.load %arg6[%c0_13, %c0_14, %c0_15] : memref<1x2x4xf32, #tpu.memory_space<vmem>>, vector<1x2x4xf32>
    %cst_16 = arith.constant dense<0.000000e+00> : vector<2x4xf32>
    %29 = vector.multi_reduction <add>, %21, %cst_16 [2] : vector<2x4x1024xf32> to vector<2x4xf32>
    %30 = vector.shape_cast %29 : vector<2x4xf32> to vector<1x2x4xf32>
    %31 = arith.addf %28, %30 : vector<1x2x4xf32>
    %c0_17 = arith.constant 0 : index
    %c0_18 = arith.constant 0 : index
    %c0_19 = arith.constant 0 : index
    %32 = vector.load %arg6[%c0_17, %c0_18, %c0_19] : memref<1x2x4xf32, #tpu.memory_space<vmem>>, vector<1x2x4xf32>
    tpu.vector_store %arg6[%c0_17, %c0_18, %c0_19], %31 {strides = array<i32>} : memref<1x2x4xf32, #tpu.memory_space<vmem>>, vector<1x2x4xf32>,
    %c0_20 = arith.constant 0 : index
    %c0_21 = arith.constant 0 : index
    %c0_22 = arith.constant 0 : index
    %33 = vector.load %arg5[%c0_20, %c0_21, %c0_22] : memref<1x2x4xf32, #tpu.memory_space<vmem>>, vector<1x2x4xf32>
    %cst_23 = arith.constant dense<0.000000e+00> : vector<2x4xf32>
    %34 = vector.multi_reduction <add>, %15, %cst_23 [2] : vector<2x4x1024xf32> to vector<2x4xf32>
    %35 = vector.shape_cast %34 : vector<2x4xf32> to vector<1x2x4xf32>
    %36 = arith.addf %33, %35 : vector<1x2x4xf32>
    %c0_24 = arith.constant 0 : index
    %c0_25 = arith.constant 0 : index
    %c0_26 = arith.constant 0 : index
    %37 = vector.load %arg5[%c0_24, %c0_25, %c0_26] : memref<1x2x4xf32, #tpu.memory_space<vmem>>, vector<1x2x4xf32>
    tpu.vector_store %arg5[%c0_24, %c0_25, %c0_26], %36 {strides = array<i32>} : memref<1x2x4xf32, #tpu.memory_space<vmem>>, vector<1x2x4xf32>,
    return
  }
  func.func @transform_0(%arg0: i32, %arg1: i32) -> (i32, i32, i32) {
    %c1_i32 = arith.constant 1 : i32
    %0 = arith.muli %arg0, %c1_i32 : i32
    %1 = arith.addi %0, %arg1 : i32
    %c0_i32 = arith.constant 0 : i32
    %c0_i32_0 = arith.constant 0 : i32
    %c0_i32_1 = arith.constant 0 : i32
    return %c0_i32, %c0_i32_0, %1 : i32, i32, i32
  }
  func.func @transform_1(%arg0: i32, %arg1: i32) -> (i32, i32) {
    %c1_i32 = arith.constant 1 : i32
    %0 = arith.muli %arg0, %c1_i32 : i32
    %1 = arith.addi %0, %arg1 : i32
    %c0_i32 = arith.constant 0 : i32
    %c0_i32_0 = arith.constant 0 : i32
    return %c0_i32, %1 : i32, i32
  }
  func.func @transform_2(%arg0: i32, %arg1: i32) -> (i32, i32, i32) {
    %c0_i32 = arith.constant 0 : i32
    %c0_i32_0 = arith.constant 0 : i32
    %c0_i32_1 = arith.constant 0 : i32
    return %arg0, %c0_i32, %c0_i32_0 : i32, i32, i32
  }
  func.func @transform_3(%arg0: i32, %arg1: i32) -> (i32, i32, i32) {
    %c0_i32 = arith.constant 0 : i32
    %c0_i32_0 = arith.constant 0 : i32
    %c0_i32_1 = arith.constant 0 : i32
    return %arg0, %c0_i32, %c0_i32_0 : i32, i32, i32
  }
  func.func @transform_4(%arg0: i32, %arg1: i32) -> (i32, i32, i32) {
    %c0_i32 = arith.constant 0 : i32
    %c0_i32_0 = arith.constant 0 : i32
    %c0_i32_1 = arith.constant 0 : i32
    return %arg0, %c0_i32, %c0_i32_0 : i32, i32, i32
  }
}

</mosaic_0001>

<llo_original>
// kernel: tpu_custom_call.1
$region0: #{tpu_custom_call.1}
  #allocation0 [shape = 'u32[]', space=smem, size = 0x4, offset = 0x4, fixed_abs, tag = 'smem constant byte address 0x4 - core index']
  #allocation1 [shape = 'u32[144,128]{1,0:T(1,128)}', space=vmem, size = 0x12000, scoped, tag = 'internal scratch']
  %s0 = inlined_call_operand.hbm [shape: f32[2,4,1024], index: 0, kind: input, shape index: {}]
  %s1 = inlined_call_operand.hbm [shape: s16[2,1024], index: 1, kind: input, shape index: {}]
  %s2 = inlined_call_operand.hbm [shape: f32[1,2,4], index: 2, kind: output, shape index: {0}]
  %s3 = inlined_call_operand.hbm [shape: f32[1,2,4], index: 3, kind: output, shape index: {1}]
  %s4 = inlined_call_operand.hbm [shape: f32[1,2,4], index: 4, kind: output, shape index: {2}]
  %5 = xla_tuple %s2, %s3, %s4
  %s6 = sld [smem:[#allocation0]]
  $region46: #{tpu_custom_call.1} parent=0
    _
  %s8 = ssub.s32 1, %s6
  %s9 = scalar_select 0, %s8, %s6
  $region1: #{tpu_custom_call.1} parent=0
    #allocation2 [shape = 'u8[32768]{0}', space=vmem, size = 0x8000, scoped, tag = 'input window, operand 0, single buffered']
    #allocation3 [shape = 's32[1]{0}', space=sflag, size = 0x4, scoped, tag = 'scoped memory for tpu_custom_call.1']
    #allocation4 [shape = 's32[1]{0}', space=sflag, size = 0x4, scoped, tag = 'scoped memory for tpu_custom_call.1']
    #allocation5 [shape = 'u8[4096]{0}', space=vmem, size = 0x1000, scoped, tag = 'input window, operand 1, single buffered']
    #allocation6 [shape = 's32[1]{0}', space=sflag, size = 0x4, scoped, tag = 'scoped memory for tpu_custom_call.1']
    #allocation7 [shape = 'u8[1024]{0}', space=vmem, size = 0x400, scoped, tag = 'output window, operand 0, single buffered']
    #allocation8 [shape = 'u8[1024]{0}', space=vmem, size = 0x400, scoped, tag = 'output window, operand 1, single buffered']
    #allocation9 [shape = 's32[1]{0}', space=sflag, size = 0x4, scoped, tag = 'scoped memory for tpu_custom_call.1']
    #allocation10 [shape = 'u8[1024]{0}', space=vmem, size = 0x400, scoped, tag = 'output window, operand 2, single buffered']
    %10 = vsyncpa [#allocation3], 0
    %11 = vsyncpa [#allocation6], 0
    %12 = vsyncpa [#allocation4], 0
    %13 = vsyncpa [#allocation9], 0
    // Predicated region
    $region2: #{tpu_custom_call.1} parent=1 // pred_check
      _
    $region3: #{tpu_custom_call.1} parent=1 // pred_check_branch
      %15 = sbr.rel (0) target = $region5
    $region4: #{tpu_custom_call.1} parent=1 // pred_region
      %s16 = sadd.s32 0, 0
      %s17 = smul.u32 8, %s16
      %s19 = ssub.s32 1024, 1024
      %20 = vsyncadd [#allocation3], %s19
      %s21 = smul.addr %s17, 64
      %s22 = scalar_lea.hbm %s0, %s21
      %s23 = sshll.u32 [#allocation2], 4
      %s24 = int_to_ptr.vmem [resolvable:$true] %s23
      %29 = dma.hbm_to_vmem [thread:$0]  %s22, 1024, %s24, [#allocation3], 512, 512, 32
    $region5: #{tpu_custom_call.1} parent=1 // pred_fallthru
      _
    // Predicated region
    $region6: #{tpu_custom_call.1} parent=1 // pred_check
      _
    $region7: #{tpu_custom_call.1} parent=1 // pred_check_branch
      %31 = sbr.rel (0) target = $region9
    $region8: #{tpu_custom_call.1} parent=1 // pred_region
      %s32 = sadd.s32 0, 0
      %s33 = smul.u32 8, %s32
      %s35 = ssub.s32 128, 128
      %36 = vsyncadd [#allocation6], %s35
      %s37 = smul.addr %s33, 16
      %s38 = scalar_lea.hbm %s1, %s37
      %s40 = sshll.u32 [#allocation5], 4
      %s41 = int_to_ptr.vmem [resolvable:$true] %s40
      %43 = dma.hbm_to_vmem [thread:$0]  %s38, 128, %s41, [#allocation6]
    $region9: #{tpu_custom_call.1} parent=1 // pred_fallthru
      _
    // Predicated region
    $region10: #{tpu_custom_call.1} parent=1 // pred_check
      _
    $region11: #{tpu_custom_call.1} parent=1 // pred_check_branch
      %45 = sbr.rel (0) target = $region13
    $region12: #{tpu_custom_call.1} parent=1 // pred_region
      %46 = dma.done [#allocation3], 1024
    $region13: #{tpu_custom_call.1} parent=1 // pred_fallthru
      _
    // Predicated region
    $region14: #{tpu_custom_call.1} parent=1 // pred_check
      _
    $region15: #{tpu_custom_call.1} parent=1 // pred_check_branch
      %48 = sbr.rel (0) target = $region17
    $region16: #{tpu_custom_call.1} parent=1 // pred_region
      %49 = dma.done [#allocation6], 128
    $region17: #{tpu_custom_call.1} parent=1 // pred_fallthru
      _
    %s50 = sadd.s32 0, 0
    %s51 = smul.u32 8, %s50
    %s52 = sadd.s32 0, 0
    %s53 = smul.u32 8, %s52
    %p54 = scmp.eq.s32.totalorder 0, 0
    // Predicated region
    $region18: #{tpu_custom_call.1} parent=1 // pred_check
      %p55 = pneg %p54
    $region19: #{tpu_custom_call.1} parent=1 // pred_check_branch
      %57 = sbr.rel (%p55) target = $region21
    $region20: #{tpu_custom_call.1} parent=1 // pred_region
      %vm58 = vcmask 25600
      %59 = vst.msk [vmem:[#allocation7] sm:$0x3] %vm58, 0.0
      %60 = vst.msk [vmem:[#allocation8] sm:$0x3] %vm58, 0.0
      %61 = vst.msk [vmem:[#allocation10] sm:$0x3] %vm58, 0.0
    $region21: #{tpu_custom_call.1} parent=1 // pred_fallthru
      _
    %v62 = vld [vmem:[#allocation2] sm:$0xff]
    %v63 = vld [vmem:[#allocation2 + $0x8] sm:$0xff]
    %v64 = vld [vmem:[#allocation2 + $0x10] sm:$0xff]
    %v65 = vld [vmem:[#allocation2 + $0x18] sm:$0xff]
    %v66 = vld [vmem:[#allocation2 + $0x20] sm:$0xff]
    %v67 = vld [vmem:[#allocation2 + $0x28] sm:$0xff]
    %v68 = vld [vmem:[#allocation2 + $0x30] sm:$0xff]
    %v69 = vld [vmem:[#allocation2 + $0x38] sm:$0xff]
    %v70 = vld [vmem:[#allocation5] sm:$0xff]
    %v71 = vunpack.c.l.b16 %v70
    %v72 = vunpack.c.h.b16 %v70
    %v81 = vcombine.high %v62, %v62
    %v82 = vcombine.high %v63, %v63
    %v83 = vcombine.high %v64, %v64
    %v84 = vcombine.high %v65, %v65
    %v85 = vcombine.high %v66, %v66
    %v86 = vcombine.high %v67, %v67
    %v87 = vcombine.high %v68, %v68
    %v88 = vcombine.high %v69, %v69
    %vm97 = vcmask 1043456
    %v98 = vsel %vm97, %v62, -inf
    %v99 = vrot.slane %v98, 4
    %v100 = vmax.f32 %v98, %v99
    %v101 = vrot.slane %v100, 2
    %v102 = vmax.f32 %v100, %v101
    %v103 = vrot.slane %v102, 1
    %v104 = vmax.f32 %v102, %v103
    %v105 = vsel %vm97, %v81, -inf
    %v106 = vrot.slane %v105, 4
    %v107 = vmax.f32 %v105, %v106
    %v108 = vrot.slane %v107, 2
    %v109 = vmax.f32 %v107, %v108
    %v110 = vrot.slane %v109, 1
    %v111 = vmax.f32 %v109, %v110
    %v112 = vsel %vm97, %v63, -inf
    %v113 = vrot.slane %v112, 4
    %v114 = vmax.f32 %v112, %v113
    %v115 = vrot.slane %v114, 2
    %v116 = vmax.f32 %v114, %v115
    %v117 = vrot.slane %v116, 1
    %v118 = vmax.f32 %v116, %v117
    %v119 = vsel %vm97, %v82, -inf
    %v120 = vrot.slane %v119, 4
    %v121 = vmax.f32 %v119, %v120
    %v122 = vrot.slane %v121, 2
    %v123 = vmax.f32 %v121, %v122
    %v124 = vrot.slane %v123, 1
    %v125 = vmax.f32 %v123, %v124
    %v126 = vsel %vm97, %v64, -inf
    %v127 = vrot.slane %v126, 4
    %v128 = vmax.f32 %v126, %v127
    %v129 = vrot.slane %v128, 2
    %v130 = vmax.f32 %v128, %v129
    %v131 = vrot.slane %v130, 1
    %v132 = vmax.f32 %v130, %v131
    %v133 = vsel %vm97, %v83, -inf
    %v134 = vrot.slane %v133, 4
    %v135 = vmax.f32 %v133, %v134
    %v136 = vrot.slane %v135, 2
    %v137 = vmax.f32 %v135, %v136
    %v138 = vrot.slane %v137, 1
    %v139 = vmax.f32 %v137, %v138
    %v140 = vsel %vm97, %v65, -inf
    %v141 = vrot.slane %v140, 4
    %v142 = vmax.f32 %v140, %v141
    %v143 = vrot.slane %v142, 2
    %v144 = vmax.f32 %v142, %v143
    %v145 = vrot.slane %v144, 1
    %v146 = vmax.f32 %v144, %v145
    %v147 = vsel %vm97, %v84, -inf
    %v148 = vrot.slane %v147, 4
    %v149 = vmax.f32 %v147, %v148
    %v150 = vrot.slane %v149, 2
    %v151 = vmax.f32 %v149, %v150
    %v152 = vrot.slane %v151, 1
    %v153 = vmax.f32 %v151, %v152
    %v154 = vsel %vm97, %v66, -inf
    %v155 = vrot.slane %v154, 4
    %v156 = vmax.f32 %v154, %v155
    %v157 = vrot.slane %v156, 2
    %v158 = vmax.f32 %v156, %v157
    %v159 = vrot.slane %v158, 1
    %v160 = vmax.f32 %v158, %v159
    %v161 = vsel %vm97, %v85, -inf
    %v162 = vrot.slane %v161, 4
    %v163 = vmax.f32 %v161, %v162
    %v164 = vrot.slane %v163, 2
    %v165 = vmax.f32 %v163, %v164
    %v166 = vrot.slane %v165, 1
    %v167 = vmax.f32 %v165, %v166
    %v168 = vsel %vm97, %v67, -inf
    %v169 = vrot.slane %v168, 4
    %v170 = vmax.f32 %v168, %v169
    %v171 = vrot.slane %v170, 2
    %v172 = vmax.f32 %v170, %v171
    %v173 = vrot.slane %v172, 1
    %v174 = vmax.f32 %v172, %v173
    %v175 = vsel %vm97, %v86, -inf
    %v176 = vrot.slane %v175, 4
    %v177 = vmax.f32 %v175, %v176
    %v178 = vrot.slane %v177, 2
    %v179 = vmax.f32 %v177, %v178
    %v180 = vrot.slane %v179, 1
    %v181 = vmax.f32 %v179, %v180
    %v182 = vsel %vm97, %v68, -inf
    %v183 = vrot.slane %v182, 4
    %v184 = vmax.f32 %v182, %v183
    %v185 = vrot.slane %v184, 2
    %v186 = vmax.f32 %v184, %v185
    %v187 = vrot.slane %v186, 1
    %v188 = vmax.f32 %v186, %v187
    %v189 = vsel %vm97, %v87, -inf
    %v190 = vrot.slane %v189, 4
    %v191 = vmax.f32 %v189, %v190
    %v192 = vrot.slane %v191, 2
    %v193 = vmax.f32 %v191, %v192
    %v194 = vrot.slane %v193, 1
    %v195 = vmax.f32 %v193, %v194
    %v196 = vsel %vm97, %v69, -inf
    %v197 = vrot.slane %v196, 4
    %v198 = vmax.f32 %v196, %v197
    %v199 = vrot.slane %v198, 2
    %v200 = vmax.f32 %v198, %v199
    %v201 = vrot.slane %v200, 1
    %v202 = vmax.f32 %v200, %v201
    %v203 = vsel %vm97, %v88, -inf
    %v204 = vrot.slane %v203, 4
    %v205 = vmax.f32 %v203, %v204
    %v206 = vrot.slane %v205, 2
    %v207 = vmax.f32 %v205, %v206
    %v208 = vrot.slane %v207, 1
    %v209 = vmax.f32 %v207, %v208
    %v226 = vcombine.low %v104, %v111
    %v227 = vcombine.low %v118, %v125
    %v228 = vcombine.low %v132, %v139
    %v229 = vcombine.low %v146, %v153
    %v230 = vcombine.low %v160, %v167
    %v231 = vcombine.low %v174, %v181
    %v232 = vcombine.low %v188, %v195
    %v233 = vcombine.low %v202, %v209
    %v242 = vsub.f32 %v62, %v226
    %v243 = vsub.f32 %v63, %v227
    %v244 = vsub.f32 %v64, %v228
    %v245 = vsub.f32 %v65, %v229
    %v246 = vsub.f32 %v66, %v230
    %v247 = vsub.f32 %v67, %v231
    %v248 = vsub.f32 %v68, %v232
    %v249 = vsub.f32 %v69, %v233
    %v250 = vmul.f32 %v242, 1.442695
    %v251 = vpow.pop %v250
    %v252 = vmul.f32 %v243, 1.442695
    %v253 = vpow.pop %v252
    %v254 = vmul.f32 %v244, 1.442695
    %v255 = vpow.pop %v254
    %v256 = vmul.f32 %v245, 1.442695
    %v257 = vpow.pop %v256
    %v258 = vmul.f32 %v246, 1.442695
    %v259 = vpow.pop %v258
    %v260 = vmul.f32 %v247, 1.442695
    %v261 = vpow.pop %v260
    %v262 = vmul.f32 %v248, 1.442695
    %v263 = vpow.pop %v262
    %v264 = vmul.f32 %v249, 1.442695
    %v265 = vpow.pop %v264
    %v274 = vcombine.high %v251, %v251
    %v275 = vcombine.high %v253, %v253
    %v276 = vcombine.high %v255, %v255
    %v277 = vcombine.high %v257, %v257
    %v278 = vcombine.high %v259, %v259
    %v279 = vcombine.high %v261, %v261
    %v280 = vcombine.high %v263, %v263
    %v281 = vcombine.high %v265, %v265
    %v290 = vsel %vm97, %v251, 0.0
    %v291 = vrot.slane %v290, 4
    %v292 = vadd.f32 %v290, %v291
    %v293 = vrot.slane %v292, 2
    %v294 = vadd.f32 %v292, %v293
    %v295 = vrot.slane %v294, 1
    %v296 = vadd.f32 %v294, %v295
    %v297 = vsel %vm97, %v274, 0.0
    %v298 = vrot.slane %v297, 4
    %v299 = vadd.f32 %v297, %v298
    %v300 = vrot.slane %v299, 2
    %v301 = vadd.f32 %v299, %v300
    %v302 = vrot.slane %v301, 1
    %v303 = vadd.f32 %v301, %v302
    %v304 = vsel %vm97, %v253, 0.0
    %v305 = vrot.slane %v304, 4
    %v306 = vadd.f32 %v304, %v305
    %v307 = vrot.slane %v306, 2
    %v308 = vadd.f32 %v306, %v307
    %v309 = vrot.slane %v308, 1
    %v310 = vadd.f32 %v308, %v309
    %v311 = vsel %vm97, %v275, 0.0
    %v312 = vrot.slane %v311, 4
    %v313 = vadd.f32 %v311, %v312
    %v314 = vrot.slane %v313, 2
    %v315 = vadd.f32 %v313, %v314
    %v316 = vrot.slane %v315, 1
    %v317 = vadd.f32 %v315, %v316
    %v318 = vsel %vm97, %v255, 0.0
    %v319 = vrot.slane %v318, 4
    %v320 = vadd.f32 %v318, %v319
    %v321 = vrot.slane %v320, 2
    %v322 = vadd.f32 %v320, %v321
    %v323 = vrot.slane %v322, 1
    %v324 = vadd.f32 %v322, %v323
    %v325 = vsel %vm97, %v276, 0.0
    %v326 = vrot.slane %v325, 4
    %v327 = vadd.f32 %v325, %v326
    %v328 = vrot.slane %v327, 2
    %v329 = vadd.f32 %v327, %v328
    %v330 = vrot.slane %v329, 1
    %v331 = vadd.f32 %v329, %v330
    %v332 = vsel %vm97, %v257, 0.0
    %v333 = vrot.slane %v332, 4
    %v334 = vadd.f32 %v332, %v333
    %v335 = vrot.slane %v334, 2
    %v336 = vadd.f32 %v334, %v335
    %v337 = vrot.slane %v336, 1
    %v338 = vadd.f32 %v336, %v337
    %v339 = vsel %vm97, %v277, 0.0
    %v340 = vrot.slane %v339, 4
    %v341 = vadd.f32 %v339, %v340
    %v342 = vrot.slane %v341, 2
    %v343 = vadd.f32 %v341, %v342
    %v344 = vrot.slane %v343, 1
    %v345 = vadd.f32 %v343, %v344
    %v346 = vsel %vm97, %v259, 0.0
    %v347 = vrot.slane %v346, 4
    %v348 = vadd.f32 %v346, %v347
    %v349 = vrot.slane %v348, 2
    %v350 = vadd.f32 %v348, %v349
    %v351 = vrot.slane %v350, 1
    %v352 = vadd.f32 %v350, %v351
    %v353 = vsel %vm97, %v278, 0.0
    %v354 = vrot.slane %v353, 4
    %v355 = vadd.f32 %v353, %v354
    %v356 = vrot.slane %v355, 2
    %v357 = vadd.f32 %v355, %v356
    %v358 = vrot.slane %v357, 1
    %v359 = vadd.f32 %v357, %v358
    %v360 = vsel %vm97, %v261, 0.0
    %v361 = vrot.slane %v360, 4
    %v362 = vadd.f32 %v360, %v361
    %v363 = vrot.slane %v362, 2
    %v364 = vadd.f32 %v362, %v363
    %v365 = vrot.slane %v364, 1
    %v366 = vadd.f32 %v364, %v365
    %v367 = vsel %vm97, %v279, 0.0
    %v368 = vrot.slane %v367, 4
    %v369 = vadd.f32 %v367, %v368
    %v370 = vrot.slane %v369, 2
    %v371 = vadd.f32 %v369, %v370
    %v372 = vrot.slane %v371, 1
    %v373 = vadd.f32 %v371, %v372
    %v374 = vsel %vm97, %v263, 0.0
    %v375 = vrot.slane %v374, 4
    %v376 = vadd.f32 %v374, %v375
    %v377 = vrot.slane %v376, 2
    %v378 = vadd.f32 %v376, %v377
    %v379 = vrot.slane %v378, 1
    %v380 = vadd.f32 %v378, %v379
    %v381 = vsel %vm97, %v280, 0.0
    %v382 = vrot.slane %v381, 4
    %v383 = vadd.f32 %v381, %v382
    %v384 = vrot.slane %v383, 2
    %v385 = vadd.f32 %v383, %v384
    %v386 = vrot.slane %v385, 1
    %v387 = vadd.f32 %v385, %v386
    %v388 = vsel %vm97, %v265, 0.0
    %v389 = vrot.slane %v388, 4
    %v390 = vadd.f32 %v388, %v389
    %v391 = vrot.slane %v390, 2
    %v392 = vadd.f32 %v390, %v391
    %v393 = vrot.slane %v392, 1
    %v394 = vadd.f32 %v392, %v393
    %v395 = vsel %vm97, %v281, 0.0
    %v396 = vrot.slane %v395, 4
    %v397 = vadd.f32 %v395, %v396
    %v398 = vrot.slane %v397, 2
    %v399 = vadd.f32 %v397, %v398
    %v400 = vrot.slane %v399, 1
    %v401 = vadd.f32 %v399, %v400
    %v402 = vrcp.pop %v296
    %v403 = vrcp.pop %v303
    %v404 = vrcp.pop %v310
    %v405 = vrcp.pop %v317
    %v406 = vrcp.pop %v324
    %v407 = vrcp.pop %v331
    %v408 = vrcp.pop %v338
    %v409 = vrcp.pop %v345
    %v410 = vrcp.pop %v352
    %v411 = vrcp.pop %v359
    %v412 = vrcp.pop %v366
    %v413 = vrcp.pop %v373
    %v414 = vrcp.pop %v380
    %v415 = vrcp.pop %v387
    %v416 = vrcp.pop %v394
    %v417 = vrcp.pop %v401
    %v434 = vcombine.low %v402, %v403
    %v435 = vcombine.low %v404, %v405
    %v436 = vcombine.low %v406, %v407
    %v437 = vcombine.low %v408, %v409
    %v438 = vcombine.low %v410, %v411
    %v439 = vcombine.low %v412, %v413
    %v440 = vcombine.low %v414, %v415
    %v441 = vcombine.low %v416, %v417
    %v450 = vmul.f32 %v251, %v434
    %v451 = vmul.f32 %v253, %v435
    %v452 = vmul.f32 %v255, %v436
    %v453 = vmul.f32 %v257, %v437
    %v454 = vmul.f32 %v259, %v438
    %v455 = vmul.f32 %v261, %v439
    %v456 = vmul.f32 %v263, %v440
    %v457 = vmul.f32 %v265, %v441
    %v458 = vlaneseq
    %v459 = vshrl.u32 %v458, 7
    %v461 = vunpack.c.l.s4 1966171168
    %v462 = vunpack.c.0.s8 %v461
    %v463 = vlaneseq
    %v464 = vshrl.u32 %v463, 7
    %v465 = vsub.s32 %v462, %v464
    %v466 = vrot.slane %v71, %v465
    %v468 = vunpack.c.l.s4 1966171168
    %v469 = vunpack.c.0.s8 %v468
    %v470 = vlaneseq
    %v471 = vshrl.u32 %v470, 7
    %v472 = vsub.s32 %v469, %v471
    %v473 = vrot.slane %v72, %v472
    %v474 = vcombine.low %v466, %v473
    %v475 = vcombine.high %v466, %v473
    %v476 = vlaneseq
    %v477 = vshrl.u32 %v476, 7
    %v478 = vsub.s32 0, %v477
    %v479 = vrot.slane %v474, %v478
    %v480 = vlaneseq
    %v481 = vshrl.u32 %v480, 7
    %v482 = vsub.s32 1, %v481
    %v483 = vrot.slane %v474, %v482
    %v484 = vlaneseq
    %v485 = vshrl.u32 %v484, 7
    %v486 = vsub.s32 2, %v485
    %v487 = vrot.slane %v474, %v486
    %v488 = vlaneseq
    %v489 = vshrl.u32 %v488, 7
    %v490 = vsub.s32 3, %v489
    %v491 = vrot.slane %v474, %v490
    %v492 = vlaneseq
    %v493 = vshrl.u32 %v492, 7
    %v494 = vsub.s32 4, %v493
    %v495 = vrot.slane %v474, %v494
    %v496 = vlaneseq
    %v497 = vshrl.u32 %v496, 7
    %v498 = vsub.s32 5, %v497
    %v499 = vrot.slane %v474, %v498
    %v500 = vlaneseq
    %v501 = vshrl.u32 %v500, 7
    %v502 = vsub.s32 6, %v501
    %v503 = vrot.slane %v474, %v502
    %v504 = vlaneseq
    %v505 = vshrl.u32 %v504, 7
    %v506 = vsub.s32 7, %v505
    %v507 = vrot.slane %v474, %v506
    %v508 = vlaneseq
    %v509 = vshrl.u32 %v508, 7
    %v510 = vsub.s32 0, %v509
    %v511 = vrot.slane %v475, %v510
    %v512 = vlaneseq
    %v513 = vshrl.u32 %v512, 7
    %v514 = vsub.s32 1, %v513
    %v515 = vrot.slane %v475, %v514
    %v516 = vlaneseq
    %v517 = vshrl.u32 %v516, 7
    %v518 = vsub.s32 2, %v517
    %v519 = vrot.slane %v475, %v518
    %v520 = vlaneseq
    %v521 = vshrl.u32 %v520, 7
    %v522 = vsub.s32 3, %v521
    %v523 = vrot.slane %v475, %v522
    %v524 = vlaneseq
    %v525 = vshrl.u32 %v524, 7
    %v526 = vsub.s32 4, %v525
    %v527 = vrot.slane %v475, %v526
    %v528 = vlaneseq
    %v529 = vshrl.u32 %v528, 7
    %v530 = vsub.s32 5, %v529
    %v531 = vrot.slane %v475, %v530
    %v532 = vlaneseq
    %v533 = vshrl.u32 %v532, 7
    %v534 = vsub.s32 6, %v533
    %v535 = vrot.slane %v475, %v534
    %v536 = vlaneseq
    %v537 = vshrl.u32 %v536, 7
    %v538 = vsub.s32 7, %v537
    %v539 = vrot.slane %v475, %v538
    %vm540 = vcmp.eq.s32.totalorder %v479, %v459
    %vm541 = vcmp.eq.s32.totalorder %v483, %v459
    %vm542 = vcmp.eq.s32.totalorder %v487, %v459
    %vm543 = vcmp.eq.s32.totalorder %v491, %v459
    %vm544 = vcmp.eq.s32.totalorder %v495, %v459
    %vm545 = vcmp.eq.s32.totalorder %v499, %v459
    %vm546 = vcmp.eq.s32.totalorder %v503, %v459
    %vm547 = vcmp.eq.s32.totalorder %v507, %v459
    %vm548 = vcmp.eq.s32.totalorder %v511, %v459
    %vm549 = vcmp.eq.s32.totalorder %v515, %v459
    %vm550 = vcmp.eq.s32.totalorder %v519, %v459
    %vm551 = vcmp.eq.s32.totalorder %v523, %v459
    %vm552 = vcmp.eq.s32.totalorder %v527, %v459
    %vm553 = vcmp.eq.s32.totalorder %v531, %v459
    %vm554 = vcmp.eq.s32.totalorder %v535, %v459
    %vm555 = vcmp.eq.s32.totalorder %v539, %v459
    %v556 = vsel %vm540, 1, 0
    %v557 = vsel %vm541, 1, 0
    %v558 = vsel %vm542, 1, 0
    %v559 = vsel %vm543, 1, 0
    %v560 = vsel %vm544, 1, 0
    %v561 = vsel %vm545, 1, 0
    %v562 = vsel %vm546, 1, 0
    %v563 = vsel %vm547, 1, 0
    %v564 = vsel %vm548, 1, 0
    %v565 = vsel %vm549, 1, 0
    %v566 = vsel %vm550, 1, 0
    %v567 = vsel %vm551, 1, 0
    %v568 = vsel %vm552, 1, 0
    %v569 = vsel %vm553, 1, 0
    %v570 = vsel %vm554, 1, 0
    %v571 = vsel %vm555, 1, 0
    %v572 = vcvt.s32.f32 %v556
    %v573 = vcvt.s32.f32 %v557
    %v574 = vcvt.s32.f32 %v558
    %v575 = vcvt.s32.f32 %v559
    %v576 = vcvt.s32.f32 %v560
    %v577 = vcvt.s32.f32 %v561
    %v578 = vcvt.s32.f32 %v562
    %v579 = vcvt.s32.f32 %v563
    %v580 = vcvt.s32.f32 %v564
    %v581 = vcvt.s32.f32 %v565
    %v582 = vcvt.s32.f32 %v566
    %v583 = vcvt.s32.f32 %v567
    %v584 = vcvt.s32.f32 %v568
    %v585 = vcvt.s32.f32 %v569
    %v586 = vcvt.s32.f32 %v570
    %v587 = vcvt.s32.f32 %v571
    %v588 = vld [vmem:[#allocation7] sm:$0x3]
    %v605 = vcombine.low %v572, %v573
    %v606 = vcombine.low %v574, %v575
    %v607 = vcombine.low %v576, %v577
    %v608 = vcombine.low %v578, %v579
    %v609 = vcombine.low %v580, %v581
    %v610 = vcombine.low %v582, %v583
    %v611 = vcombine.low %v584, %v585
    %v612 = vcombine.low %v586, %v587
    %v621 = vmul.f32 %v450, %v605
    %v622 = vmul.f32 %v451, %v606
    %v623 = vmul.f32 %v452, %v607
    %v624 = vmul.f32 %v453, %v608
    %v625 = vmul.f32 %v454, %v609
    %v626 = vmul.f32 %v455, %v610
    %v627 = vmul.f32 %v456, %v611
    %v628 = vmul.f32 %v457, %v612
    %v637 = vcombine.high %v621, %v621
    %v638 = vcombine.high %v622, %v622
    %v639 = vcombine.high %v623, %v623
    %v640 = vcombine.high %v624, %v624
    %v641 = vcombine.high %v625, %v625
    %v642 = vcombine.high %v626, %v626
    %v643 = vcombine.high %v627, %v627
    %v644 = vcombine.high %v628, %v628
    %v653 = vsel %vm97, %v621, 0.0
    %v654 = vsel %vm97, %v637, 0.0
    %v655 = vadd.f32 %v653, %v654
    %v656 = vsel %vm97, %v622, 0.0
    %v657 = vadd.f32 %v655, %v656
    %v658 = vsel %vm97, %v638, 0.0
    %v659 = vadd.f32 %v657, %v658
    %v660 = vsel %vm97, %v623, 0.0
    %v661 = vadd.f32 %v659, %v660
    %v662 = vsel %vm97, %v639, 0.0
    %v663 = vadd.f32 %v661, %v662
    %v664 = vsel %vm97, %v624, 0.0
    %v665 = vadd.f32 %v663, %v664
    %v666 = vsel %vm97, %v640, 0.0
    %v667 = vadd.f32 %v665, %v666
    %668 = vadd.xlane.f32.xlu0 %v667
    %v669 = vpop.xlane.xlu0 %668
    %v670 = vsel %vm97, %v625, 0.0
    %v671 = vsel %vm97, %v641, 0.0
    %v672 = vadd.f32 %v670, %v671
    %v673 = vsel %vm97, %v626, 0.0
    %v674 = vadd.f32 %v672, %v673
    %v675 = vsel %vm97, %v642, 0.0
    %v676 = vadd.f32 %v674, %v675
    %v677 = vsel %vm97, %v627, 0.0
    %v678 = vadd.f32 %v676, %v677
    %v679 = vsel %vm97, %v643, 0.0
    %v680 = vadd.f32 %v678, %v679
    %v681 = vsel %vm97, %v628, 0.0
    %v682 = vadd.f32 %v680, %v681
    %v683 = vsel %vm97, %v644, 0.0
    %v684 = vadd.f32 %v682, %v683
    %685 = vadd.xlane.f32.xlu0 %v684
    %v686 = vpop.xlane.xlu0 %685
    %v689 = vlaneseq
    %v690 = vand.u32 %v689, 127
    %v691 = vlaneseq
    %v692 = vshrl.u32 %v691, 7
    %v693 = vsub.s32 %v690, %v692
    %v694 = vrot.slane %v669, %v693
    %v695 = vlaneseq
    %v696 = vshrl.u32 %v695, 7
    %v697 = vsub.s32 %v690, %v696
    %v698 = vrot.slane %v686, %v697
    %vm699 = vcmask 1041409
    %v700 = vsel %vm699, %v698, %v694
    %v702 = vadd.f32 %v588, %v700
    %vm703 = vcmask 25600
    %704 = vst.msk [vmem:[#allocation7] sm:$0x3] %vm703, %v702
    %v705 = vld [vmem:[#allocation10] sm:$0x3]
    %v706 = vsel %vm97, %v572, 0.0
    %v707 = vsel %vm97, %v573, 0.0
    %v708 = vadd.f32 %v706, %v707
    %v709 = vsel %vm97, %v574, 0.0
    %v710 = vadd.f32 %v708, %v709
    %v711 = vsel %vm97, %v575, 0.0
    %v712 = vadd.f32 %v710, %v711
    %v713 = vsel %vm97, %v576, 0.0
    %v714 = vadd.f32 %v712, %v713
    %v715 = vsel %vm97, %v577, 0.0
    %v716 = vadd.f32 %v714, %v715
    %v717 = vsel %vm97, %v578, 0.0
    %v718 = vadd.f32 %v716, %v717
    %v719 = vsel %vm97, %v579, 0.0
    %v720 = vadd.f32 %v718, %v719
    %721 = vadd.xlane.f32.xlu0 %v720
    %v722 = vpop.xlane.xlu0 %721
    %v723 = vsel %vm97, %v580, 0.0
    %v724 = vsel %vm97, %v581, 0.0
    %v725 = vadd.f32 %v723, %v724
    %v726 = vsel %vm97, %v582, 0.0
    %v727 = vadd.f32 %v725, %v726
    %v728 = vsel %vm97, %v583, 0.0
    %v729 = vadd.f32 %v727, %v728
    %v730 = vsel %vm97, %v584, 0.0
    %v731 = vadd.f32 %v729, %v730
    %v732 = vsel %vm97, %v585, 0.0
    %v733 = vadd.f32 %v731, %v732
    %v734 = vsel %vm97, %v586, 0.0
    %v735 = vadd.f32 %v733, %v734
    %v736 = vsel %vm97, %v587, 0.0
    %v737 = vadd.f32 %v735, %v736
    %738 = vadd.xlane.f32.xlu0 %v737
    %v739 = vpop.xlane.xlu0 %738
    %v742 = vlaneseq
    %v743 = vshrl.u32 %v742, 7
    %v744 = vsub.s32 %v690, %v743
    %v745 = vrot.slane %v722, %v744
    %v746 = vlaneseq
    %v747 = vshrl.u32 %v746, 7
    %v748 = vsub.s32 %v690, %v747
    %v749 = vrot.slane %v739, %v748
    %v750 = vsel %vm699, %v749, %v745
    %v752 = vadd.f32 %v705, %v750
    %753 = vst.msk [vmem:[#allocation10] sm:$0x3] %vm703, %v752
    %v754 = vld [vmem:[#allocation8] sm:$0x3]
    %v763 = vcombine.high %v450, %v450
    %v764 = vcombine.high %v451, %v451
    %v765 = vcombine.high %v452, %v452
    %v766 = vcombine.high %v453, %v453
    %v767 = vcombine.high %v454, %v454
    %v768 = vcombine.high %v455, %v455
    %v769 = vcombine.high %v456, %v456
    %v770 = vcombine.high %v457, %v457
    %v779 = vsel %vm97, %v450, 0.0
    %v780 = vsel %vm97, %v763, 0.0
    %v781 = vadd.f32 %v779, %v780
    %v782 = vsel %vm97, %v451, 0.0
    %v783 = vadd.f32 %v781, %v782
    %v784 = vsel %vm97, %v764, 0.0
    %v785 = vadd.f32 %v783, %v784
    %v786 = vsel %vm97, %v452, 0.0
    %v787 = vadd.f32 %v785, %v786
    %v788 = vsel %vm97, %v765, 0.0
    %v789 = vadd.f32 %v787, %v788
    %v790 = vsel %vm97, %v453, 0.0
    %v791 = vadd.f32 %v789, %v790
    %v792 = vsel %vm97, %v766, 0.0
    %v793 = vadd.f32 %v791, %v792
    %794 = vadd.xlane.f32.xlu0 %v793
    %v795 = vpop.xlane.xlu0 %794
    %v796 = vsel %vm97, %v454, 0.0
    %v797 = vsel %vm97, %v767, 0.0
    %v798 = vadd.f32 %v796, %v797
    %v799 = vsel %vm97, %v455, 0.0
    %v800 = vadd.f32 %v798, %v799
    %v801 = vsel %vm97, %v768, 0.0
    %v802 = vadd.f32 %v800, %v801
    %v803 = vsel %vm97, %v456, 0.0
    %v804 = vadd.f32 %v802, %v803
    %v805 = vsel %vm97, %v769, 0.0
    %v806 = vadd.f32 %v804, %v805
    %v807 = vsel %vm97, %v457, 0.0
    %v808 = vadd.f32 %v806, %v807
    %v809 = vsel %vm97, %v770, 0.0
    %v810 = vadd.f32 %v808, %v809
    %811 = vadd.xlane.f32.xlu0 %v810
    %v812 = vpop.xlane.xlu0 %811
    %v815 = vlaneseq
    %v816 = vshrl.u32 %v815, 7
    %v817 = vsub.s32 %v690, %v816
    %v818 = vrot.slane %v795, %v817
    %v819 = vlaneseq
    %v820 = vshrl.u32 %v819, 7
    %v821 = vsub.s32 %v690, %v820
    %v822 = vrot.slane %v812, %v821
    %v823 = vsel %vm699, %v822, %v818
    %v825 = vadd.f32 %v754, %v823
    %826 = vst.msk [vmem:[#allocation8] sm:$0x3] %vm703, %v825
    // Predicated region
    $region22: #{tpu_custom_call.1} parent=1 // pred_check
      _
    $region23: #{tpu_custom_call.1} parent=1 // pred_check_branch
      %828 = sbr.rel (0) target = $region25
    $region24: #{tpu_custom_call.1} parent=1 // pred_region
      %s830 = ssub.s32 32, 32
      %831 = vsyncadd [#allocation4], %s830
      %s833 = sshll.u32 [#allocation7], 4
      %s834 = int_to_ptr.vmem [resolvable:$true] %s833
      %836 = dma.vmem_to_hbm [thread:$0]  %s834, 32, %s2, [#allocation4]
    $region25: #{tpu_custom_call.1} parent=1 // pred_fallthru
      _
    // Predicated region
    $region26: #{tpu_custom_call.1} parent=1 // pred_check
      _
    $region27: #{tpu_custom_call.1} parent=1 // pred_check_branch
      %838 = sbr.rel (0) target = $region29
    $region28: #{tpu_custom_call.1} parent=1 // pred_region
      %s840 = ssub.s32 32, 32
      %841 = vsyncadd [#allocation9], %s840
      %s843 = sshll.u32 [#allocation8], 4
      %s844 = int_to_ptr.vmem [resolvable:$true] %s843
      %846 = dma.vmem_to_hbm [thread:$0]  %s844, 32, %s3, [#allocation9]
    $region29: #{tpu_custom_call.1} parent=1 // pred_fallthru
      _
    // Predicated region
    $region30: #{tpu_custom_call.1} parent=1 // pred_check
      _
    $region31: #{tpu_custom_call.1} parent=1 // pred_check_branch
      %848 = sbr.rel (0) target = $region33
    $region32: #{tpu_custom_call.1} parent=1 // pred_region
      %s850 = ssub.s32 32, 32
      %851 = vsyncadd [#allocation9], %s850
      %s853 = sshll.u32 [#allocation10], 4
      %s854 = int_to_ptr.vmem [resolvable:$true] %s853
      %856 = dma.vmem_to_hbm [thread:$0]  %s854, 32, %s4, [#allocation9]
    $region33: #{tpu_custom_call.1} parent=1 // pred_fallthru
      _
    // Predicated region
    $region34: #{tpu_custom_call.1} parent=1 // pred_check
      _
    $region35: #{tpu_custom_call.1} parent=1 // pred_check_branch
      %858 = sbr.rel (0) target = $region37
    $region36: #{tpu_custom_call.1} parent=1 // pred_region
      %859 = dma.done [#allocation4], 32
    $region37: #{tpu_custom_call.1} parent=1 // pred_fallthru
      _
    // Predicated region
    $region38: #{tpu_custom_call.1} parent=1 // pred_check
      _
    $region39: #{tpu_custom_call.1} parent=1 // pred_check_branch
      %861 = sbr.rel (0) target = $region41
    $region40: #{tpu_custom_call.1} parent=1 // pred_region
      %862 = dma.done [#allocation9], 32
    $region41: #{tpu_custom_call.1} parent=1 // pred_fallthru
      _
    // Predicated region
    $region42: #{tpu_custom_call.1} parent=1 // pred_check
      _
    $region43: #{tpu_custom_call.1} parent=1 // pred_check_branch
      %864 = sbr.rel (0) target = $region45
    $region44: #{tpu_custom_call.1} parent=1 // pred_region
      %865 = dma.done [#allocation9], 32
    $region45: #{tpu_custom_call.1} parent=1 // pred_fallthru
      _
    %866 = vsyncpa [#allocation3], 1
    %867 = vsyncpa [#allocation6], 1
    %868 = vsyncpa [#allocation4], 1
    %869 = vsyncpa [#allocation9], 1

</llo_original>
